<compile_context>
chip_gen: v5e
topology: v5e:2x2
jax: 0.10.0
libtpu: 0.0.40
codegen_flags: <defaults>
</compile_context>

<pallas_src>
import functools

import jax
import jax.numpy as jnp
from jax import lax
from jax.experimental import pallas as pl
from jax.experimental.pallas import tpu as pltpu

LANES = 128
MAX_TILE_ROWS = 8192   # 8192 x 128 f32 = 4 MiB per input block
MAX_CORES = 2          # leading "parallel" axis; splits across TCs on v7x


def _pinball_kernel(n_rows, tile_rows, alpha_ref, x_ref, t_ref, out_ref):
    c = pl.program_id(0)               # core / parallel axis
    i = pl.program_id(1)               # reduction axis
    n_inner = pl.num_programs(1)
    alpha = alpha_ref[0, 0]

    @pl.when(i == 0)
    def _():
        out_ref[...] = jnp.zeros_like(out_ref)

    # pinball loss: err>0 -> alpha*err ; else (1-alpha)*(-err) == (alpha-1)*err
    err = t_ref[...].astype(jnp.float32) - x_ref[...].astype(jnp.float32)
    loss = err * jnp.where(err > 0.0, alpha, alpha - 1.0)

    # Global row offset of this (unclamped) block; rows >= n_rows are either
    # Pallas boundary padding or a duplicated (clamped) block -> must not count.
    start_row = (c * n_inner + i) * tile_rows
    valid = n_rows - start_row

    @pl.when(valid >= tile_rows)                      # fully valid (common case)
    def _():
        out_ref[...] += loss.reshape(tile_rows // 8, 8, LANES).sum(axis=0)

    @pl.when(jnp.logical_and(valid > 0, valid < tile_rows))   # straddling tail
    def _():
        row = lax.broadcasted_iota(jnp.int32, (tile_rows, LANES), 0)
        masked = jnp.where(row < valid, loss, 0.0)
        out_ref[...] += masked.reshape(tile_rows // 8, 8, LANES).sum(axis=0)

    # blocks with valid <= 0 contribute nothing


def pinball_loss(inputs, targets, alpha, reduction: str = "sum",
                 max_tile_rows: int = MAX_TILE_ROWS):
    """Pallas TPU implementation of PinBallLoss.forward (always returns sum)."""
    if isinstance(alpha, (int, float)) and not 0.0 < float(alpha) < 1.0:
        raise ValueError("Quantile should be in (0, 1) range")
    assert inputs.shape == targets.shape

    x = inputs.reshape(-1)
    t = targets.reshape(-1)
    n = x.shape[0]
    if n == 0:                                    # empty-input guard
        return jnp.zeros((), jnp.float32)

    # Only lane-pad to a multiple of 128; the zero padding contributes 0 loss.
    lane_pad = (-n) % LANES
    if lane_pad:
        x = jnp.pad(x, (0, lane_pad))
        t = jnp.pad(t, (0, lane_pad))

    n_rows = (n + lane_pad) // LANES
    x2 = x.reshape(n_rows, LANES)
    t2 = t.reshape(n_rows, LANES)

    # Round the tile to the dtype's sublane packing (8 rows for 32-bit, 16 for
    # 16-bit, 32 for 8-bit) and never (much) larger than the data itself.
    itemsize = jnp.dtype(x2.dtype).itemsize
    pack = {4: 8, 2: 16, 1: 32}.get(itemsize, 8)
    tile_rows = min(max_tile_rows, ((n_rows + pack - 1) // pack) * pack)
    tile_rows = ((tile_rows + pack - 1) // pack) * pack

    n_blocks = pl.cdiv(n_rows, tile_rows)
    # Clamp cores so single-block inputs don't pay a wasted duplicate pass.
    num_cores = min(MAX_CORES, n_blocks)
    steps = pl.cdiv(n_blocks, num_cores)

    # Clamp the block index so the DMA never reads out of bounds; duplicated
    # (clamped) blocks are masked out in-kernel via `valid <= 0`.
    def in_map(c, i):
        return (jnp.minimum(c * steps + i, n_blocks - 1), 0)

    # Runtime alpha as a tiny SMEM scalar (no recompile per alpha value).
    alpha_arr = jnp.asarray(alpha, dtype=jnp.float32).reshape(1, 1)

    # 2 inputs x 2 pipeline buffers + headroom (output/acc are tiny).
    tile_bytes = tile_rows * LANES * itemsize
    vmem_limit = int(min(48 << 20, max(16 << 20, 4 * tile_bytes + (4 << 20))))

    out = pl.pallas_call(
        functools.partial(_pinball_kernel, n_rows, tile_rows),
        out_shape=jax.ShapeDtypeStruct((num_cores * 8, LANES), jnp.float32),
        grid_spec=pltpu.PrefetchScalarGridSpec(
            num_scalar_prefetch=0,
            grid=(num_cores, steps),
            in_specs=[
                pl.BlockSpec(memory_space=pltpu.MemorySpace.SMEM),   # alpha scalar
                pl.BlockSpec((tile_rows, LANES), in_map),            # input
                pl.BlockSpec((tile_rows, LANES), in_map),            # target
            ],
            out_specs=pl.BlockSpec((8, LANES), lambda c, i: (c, 0)),
        ),
        compiler_params=pltpu.CompilerParams(
            dimension_semantics=("parallel", "arbitrary"),
            vmem_limit_bytes=vmem_limit,
        ),
    )(alpha_arr, x2, t2)

    # Tiny (num_cores*8, 128) per-core / per-lane partials -> scalar.
    return jnp.sum(out)


def pinball_loss_ref(inputs, targets, alpha: float):
    err = targets.astype(jnp.float32) - inputs.astype(jnp.float32)
    loss = jnp.where(err > 0, alpha * err, (1.0 - alpha) * (-err))
    return loss.sum()


if __name__ == "__main__":
    key = jax.random.PRNGKey(0)
    k1, k2, k3, k4, k5, k6 = jax.random.split(key, 6)
    alpha = 0.3

    # Primary: batch=2 x hidden=128, consistent with a quantile-regressor head.
    inp = jax.random.normal(k1, (2, 128), dtype=jnp.float32)
    tgt = jax.random.normal(k2, (2, 128), dtype=jnp.float32)
    out = jax.block_until_ready(pinball_loss(inp, tgt, alpha))
    ref = pinball_loss_ref(inp, tgt, alpha)
    assert jnp.allclose(out, ref, rtol=1e-5, atol=1e-5), (out, ref)

    # Secondary: awkward shape (exercises lane padding + in-kernel tail mask).
    inp2 = jax.random.normal(k3, (3, 100), dtype=jnp.float32)
    tgt2 = jax.random.normal(k4, (3, 100), dtype=jnp.float32)
    out2 = jax.block_until_ready(pinball_loss(inp2, tgt2, alpha))
    ref2 = pinball_loss_ref(inp2, tgt2, alpha)
    assert jnp.allclose(out2, ref2, rtol=1e-5, atol=1e-5), (out2, ref2)

    # Tertiary: force a tiny tile so the multi-block / two-"core" / clamped
    # duplicate-block / tail-mask paths are all exercised on small data.
    inp3 = jax.random.normal(k5, (35, 128), dtype=jnp.float32)
    tgt3 = jax.random.normal(k6, (35, 128), dtype=jnp.float32)
    out3 = jax.block_until_ready(pinball_loss(inp3, tgt3, alpha, max_tile_rows=8))
    ref3 = pinball_loss_ref(inp3, tgt3, alpha)
    assert jnp.allclose(out3, ref3, rtol=1e-5, atol=1e-4), (out3, ref3)

    print("KERNEL_OK")
</pallas_src>

<mosaic_0001>
module attributes {stable_mosaic.version = 11 : i64} {
  func.func @_pinball_kernel(%arg0: i32, %arg1: i32, %arg2: memref<1x1xf32, #tpu.memory_space<smem>>, %arg3: memref<8x128xf32, #tpu.memory_space<vmem>>, %arg4: memref<8x128xf32, #tpu.memory_space<vmem>>, %arg5: memref<8x128xf32, #tpu.memory_space<vmem>>) attributes {dimension_semantics = [#tpu.dimension_semantics<parallel>, #tpu.dimension_semantics<arbitrary>], iteration_bounds = array<i64: 1, 1>, scalar_prefetch = 0 : i64, scratch_operands = 0 : i64, tpu.core_type = #tpu.core_type<tc>, window_params = [{transform_indices = @transform_0, window_bounds = array<i64: 1, 1>}, {transform_indices = @transform_1, window_bounds = array<i64: 8, 128>}, {transform_indices = @transform_2, window_bounds = array<i64: 8, 128>}, {transform_indices = @transform_3, window_bounds = array<i64: 8, 128>}]} {
    %c0 = arith.constant 0 : index
    %c0_0 = arith.constant 0 : index
    %0 = memref.load %arg2[%c0, %c0_0] : memref<1x1xf32, #tpu.memory_space<smem>>
    %c0_i32 = arith.constant 0 : i32
    %1 = arith.cmpi eq, %arg1, %c0_i32 : i32
    %2 = arith.extui %1 : i1 to i32
    %c0_i32_1 = arith.constant 0 : i32
    %3 = arith.cmpi ne, %2, %c0_i32_1 : i32
    scf.if %3 {
      %cst_12 = arith.constant 0.000000e+00 : f32
      %26 = vector.broadcast %cst_12 : f32 to vector<8x128xf32>
      %c0_13 = arith.constant 0 : index
      %c0_14 = arith.constant 0 : index
      %27 = vector.load %arg5[%c0_13, %c0_14] : memref<8x128xf32, #tpu.memory_space<vmem>>, vector<8x128xf32>
      tpu.vector_store %arg5[%c0_13, %c0_14], %26 {strides = array<i32>} : memref<8x128xf32, #tpu.memory_space<vmem>>, vector<8x128xf32>,
    } else {
    }
    %c0_2 = arith.constant 0 : index
    %c0_3 = arith.constant 0 : index
    %4 = vector.load %arg4[%c0_2, %c0_3] : memref<8x128xf32, #tpu.memory_space<vmem>>, vector<8x128xf32>
    %c0_4 = arith.constant 0 : index
    %c0_5 = arith.constant 0 : index
    %5 = vector.load %arg3[%c0_4, %c0_5] : memref<8x128xf32, #tpu.memory_space<vmem>>, vector<8x128xf32>
    %6 = arith.subf %4, %5 : vector<8x128xf32>
    %cst = arith.constant 0.000000e+00 : f32
    %7 = vector.broadcast %cst : f32 to vector<8x128xf32>
    %8 = arith.cmpf ogt, %6, %7 : vector<8x128xf32>
    %cst_6 = arith.constant 1.000000e+00 : f32
    %9 = arith.subf %0, %cst_6 : f32
    %10 = vector.broadcast %0 : f32 to vector<8x128xf32>
    %11 = vector.broadcast %9 : f32 to vector<8x128xf32>
    %12 = arith.select %8, %10, %11 : vector<8x128xi1>, vector<8x128xf32>
    %13 = arith.mulf %6, %12 : vector<8x128xf32>
    %c1_i32 = arith.constant 1 : i32
    %14 = arith.muli %arg0, %c1_i32 : i32
    %15 = arith.addi %14, %arg1 : i32
    %c8_i32 = arith.constant 8 : i32
    %16 = arith.muli %15, %c8_i32 : i32
    %c2_i32 = arith.constant 2 : i32
    %17 = arith.subi %c2_i32, %16 : i32
    %c8_i32_7 = arith.constant 8 : i32
    %18 = arith.cmpi sge, %17, %c8_i32_7 : i32
    %19 = arith.extui %18 : i1 to i32
    %c0_i32_8 = arith.constant 0 : i32
    %20 = arith.cmpi ne, %19, %c0_i32_8 : i32
    scf.if %20 {
      %c0_12 = arith.constant 0 : index
      %c0_13 = arith.constant 0 : index
      %26 = vector.load %arg5[%c0_12, %c0_13] : memref<8x128xf32, #tpu.memory_space<vmem>>, vector<8x128xf32>
      %27 = vector.shape_cast %13 : vector<8x128xf32> to vector<1x8x128xf32>
      %cst_14 = arith.constant dense<0.000000e+00> : vector<8x128xf32>
      %28 = vector.multi_reduction <add>, %27, %cst_14 [0] : vector<1x8x128xf32> to vector<8x128xf32>
      %29 = arith.addf %26, %28 : vector<8x128xf32>
      %c0_15 = arith.constant 0 : index
      %c0_16 = arith.constant 0 : index
      %30 = vector.load %arg5[%c0_15, %c0_16] : memref<8x128xf32, #tpu.memory_space<vmem>>, vector<8x128xf32>
      tpu.vector_store %arg5[%c0_15, %c0_16], %29 {strides = array<i32>} : memref<8x128xf32, #tpu.memory_space<vmem>>, vector<8x128xf32>,
    } else {
    }
    %c0_i32_9 = arith.constant 0 : i32
    %21 = arith.cmpi sgt, %17, %c0_i32_9 : i32
    %c8_i32_10 = arith.constant 8 : i32
    %22 = arith.cmpi slt, %17, %c8_i32_10 : i32
    %23 = arith.andi %21, %22 : i1
    %24 = arith.extui %23 : i1 to i32
    %c0_i32_11 = arith.constant 0 : i32
    %25 = arith.cmpi ne, %24, %c0_i32_11 : i32
    scf.if %25 {
      %26 = tpu.iota {dimensions = array<i32: 0>} : vector<8x128xi32>
      %27 = vector.broadcast %17 : i32 to vector<8x128xi32>
      %28 = arith.cmpi slt, %26, %27 : vector<8x128xi32>
      %cst_12 = arith.constant 0.000000e+00 : f32
      %29 = vector.broadcast %cst_12 : f32 to vector<8x128xf32>
      %30 = arith.select %28, %13, %29 : vector<8x128xi1>, vector<8x128xf32>
      %c0_13 = arith.constant 0 : index
      %c0_14 = arith.constant 0 : index
      %31 = vector.load %arg5[%c0_13, %c0_14] : memref<8x128xf32, #tpu.memory_space<vmem>>, vector<8x128xf32>
      %32 = vector.shape_cast %30 : vector<8x128xf32> to vector<1x8x128xf32>
      %cst_15 = arith.constant dense<0.000000e+00> : vector<8x128xf32>
      %33 = vector.multi_reduction <add>, %32, %cst_15 [0] : vector<1x8x128xf32> to vector<8x128xf32>
      %34 = arith.addf %31, %33 : vector<8x128xf32>
      %c0_16 = arith.constant 0 : index
      %c0_17 = arith.constant 0 : index
      %35 = vector.load %arg5[%c0_16, %c0_17] : memref<8x128xf32, #tpu.memory_space<vmem>>, vector<8x128xf32>
      tpu.vector_store %arg5[%c0_16, %c0_17], %34 {strides = array<i32>} : memref<8x128xf32, #tpu.memory_space<vmem>>, vector<8x128xf32>,
    } else {
    }
    return
  }
  func.func @transform_0(%arg0: i32, %arg1: i32) -> (i32, i32) {
    %c0_i32 = arith.constant 0 : i32
    %c0_i32_0 = arith.constant 0 : i32
    %c0_i32_1 = arith.constant 0 : i32
    return %c0_i32, %c0_i32_0 : i32, i32
  }
  func.func @transform_1(%arg0: i32, %arg1: i32) -> (i32, i32) {
    %c1_i32 = arith.constant 1 : i32
    %0 = arith.muli %arg0, %c1_i32 : i32
    %1 = arith.addi %0, %arg1 : i32
    %c0_i32 = arith.constant 0 : i32
    %2 = arith.minsi %1, %c0_i32 : i32
    %c0_i32_0 = arith.constant 0 : i32
    %c0_i32_1 = arith.constant 0 : i32
    return %2, %c0_i32_0 : i32, i32
  }
  func.func @transform_2(%arg0: i32, %arg1: i32) -> (i32, i32) {
    %c1_i32 = arith.constant 1 : i32
    %0 = arith.muli %arg0, %c1_i32 : i32
    %1 = arith.addi %0, %arg1 : i32
    %c0_i32 = arith.constant 0 : i32
    %2 = arith.minsi %1, %c0_i32 : i32
    %c0_i32_0 = arith.constant 0 : i32
    %c0_i32_1 = arith.constant 0 : i32
    return %2, %c0_i32_0 : i32, i32
  }
  func.func @transform_3(%arg0: i32, %arg1: i32) -> (i32, i32) {
    %c0_i32 = arith.constant 0 : i32
    %c0_i32_0 = arith.constant 0 : i32
    return %arg0, %c0_i32 : i32, i32
  }
}

</mosaic_0001>

<llo_original>
// kernel: tpu_custom_call.1
$region0: #{tpu_custom_call.1}
  #allocation0 [shape = 'u32[]', space=smem, size = 0x4, offset = 0x4, fixed_abs, tag = 'smem constant byte address 0x4 - core index']
  #allocation1 [shape = 'u32[72,128]{1,0:T(1,128)}', space=vmem, size = 0x9000, scoped, tag = 'internal scratch']
  #allocation2 [shape = 'f32[1,1]{1,0:T(1,128)S(6)}', space=smem, size = 0x200, scoped, tag = 'scoped memory for tpu_custom_call.1']
  %s0 = inlined_call_operand.<no memory space> [shape: f32[1,1], index: 0, kind: input, shape index: {}]
  %s1 = inlined_call_operand.vmem [shape: f32[2,128], index: 1, kind: input, shape index: {}]
  %s2 = inlined_call_operand.hbm [shape: f32[2,128], index: 2, kind: input, shape index: {}]
  %s3 = inlined_call_operand.hbm [shape: f32[8,128], index: 3, kind: output, shape index: {}]
  %s4 = sld [smem:[#allocation0]]
  $region38: #{tpu_custom_call.1} parent=0
    _
  %s6 = ssub.s32 1, %s4
  %s7 = scalar_select 0, %s6, %s4
  %8 = sst [smem:[#allocation2]] %s0
  $region1: #{tpu_custom_call.1} parent=0
    #allocation3 [shape = 'u8[4096]{0}', space=vmem, size = 0x1000, scoped, tag = 'input window, operand 2, single buffered']
    #allocation4 [shape = 's32[1]{0}', space=sflag, size = 0x4, scoped, tag = 'scoped memory for tpu_custom_call.1']
    #allocation5 [shape = 's32[1]{0}', space=sflag, size = 0x4, scoped, tag = 'scoped memory for tpu_custom_call.1']
    #allocation6 [shape = 'u8[4096]{0}', space=vmem, size = 0x1000, scoped, tag = 'output window, operand 0, single buffered']
    %9 = vsyncpa [#allocation4], 0
    %10 = vsyncpa [#allocation5], 0
    // Predicated region
    $region2: #{tpu_custom_call.1} parent=1 // pred_check
      _
    $region3: #{tpu_custom_call.1} parent=1 // pred_check_branch
      %12 = sbr.rel (0) target = $region5
    $region4: #{tpu_custom_call.1} parent=1 // pred_region
      _
    $region5: #{tpu_custom_call.1} parent=1 // pred_fallthru
      _
    // Predicated region
    $region6: #{tpu_custom_call.1} parent=1 // pred_check
      _
    $region7: #{tpu_custom_call.1} parent=1 // pred_check_branch
      %14 = sbr.rel (0) target = $region9
    $region8: #{tpu_custom_call.1} parent=1 // pred_region
      %s15 = sadd.s32 0, 0
      %p16 = scmp.lt.s32.totalorder %s15, 0
      %s17 = scalar_select %p16, %s15, 0
      %s18 = smul.u32 4, %s17
      %s19 = ssub.s32 1, %s18
      %s20 = smul.u32 2, %s19
      %p21 = scmp.lt.s32.totalorder %s18, 0
      %s22 = scalar_select %p21, %s18, 0
      %s23 = smul.addr %s22, 2
      %s24 = scalar_lea.vmem %s1, %s23
      %s25 = sadd.s32 0, 0
      %p26 = scmp.lt.s32.totalorder %s25, 0
      %s27 = scalar_select %p26, %s25, 0
      %s28 = smul.u32 4, %s27
      %s29 = ssub.s32 1, %s28
      %s30 = smul.u32 2, %s29
    $region9: #{tpu_custom_call.1} parent=1 // pred_fallthru
      _
    // Predicated region
    $region10: #{tpu_custom_call.1} parent=1 // pred_check
      _
    $region11: #{tpu_custom_call.1} parent=1 // pred_check_branch
      %32 = sbr.rel (0) target = $region13
    $region12: #{tpu_custom_call.1} parent=1 // pred_region
      %s33 = sadd.s32 0, 0
      %p34 = scmp.lt.s32.totalorder %s33, 0
      %s35 = scalar_select %p34, %s33, 0
      %s36 = smul.u32 4, %s35
      %s37 = ssub.s32 1, %s36
      %s38 = smul.u32 2, %s37
      %s39 = ssub.s32 8, %s38
      %s40 = sshll.u32 %s39, 4
      %41 = vsyncadd [#allocation4], %s40
      %p42 = scmp.ne.s32.totalorder 0, %s38
      %s43 = smul.addr %s36, 2
      %s44 = scalar_lea.hbm %s2, %s43
      %s45 = smul.u32 2, %s37
      %s46 = sshll.u32 %s44, 4
      %s47 = int_to_ptr.hbm [resolvable:$true] %s46
      %s48 = sshll.u32 [#allocation3], 4
      %s49 = int_to_ptr.vmem [resolvable:$true] %s48
      %s50 = sshll.u32 %s45, 4
      %54 = dma.hbm_to_vmem [thread:$0]  (%p42), %s47, %s50, %s49, [#allocation4], 32, 32, 2
    $region13: #{tpu_custom_call.1} parent=1 // pred_fallthru
      _
    // Predicated region
    $region14: #{tpu_custom_call.1} parent=1 // pred_check
      _
    $region15: #{tpu_custom_call.1} parent=1 // pred_check_branch
      %56 = sbr.rel (0) target = $region17
    $region16: #{tpu_custom_call.1} parent=1 // pred_region
      %58 = dma.done [#allocation4], 128
    $region17: #{tpu_custom_call.1} parent=1 // pred_fallthru
      _
    %s59 = sadd.s32 0, 0
    %p60 = scmp.lt.s32.totalorder %s59, 0
    %s61 = scalar_select %p60, %s59, 0
    %s62 = smul.u32 4, %s61
    %s63 = ssub.s32 1, %s62
    %s64 = smul.u32 2, %s63
    %p65 = scmp.lt.s32.totalorder %s62, 0
    %s66 = scalar_select %p65, %s62, 0
    %s67 = smul.addr %s66, 2
    %s68 = scalar_lea.vmem %s1, %s67
    %s69 = sadd.s32 0, 0
    %p70 = scmp.lt.s32.totalorder %s69, 0
    %s71 = scalar_select %p70, %s69, 0
    %s72 = smul.u32 4, %s71
    %s73 = ssub.s32 1, %s72
    %s74 = smul.u32 2, %s73
    %p75 = scmp.lt.s32.totalorder %s72, 0
    %s76 = scalar_select %p75, %s72, 0
    %s77 = smul.addr %s76, 2
    %s78 = scalar_lea.vmem %s1, %s77
    %s79 = sadd.s32 0, 0
    %p80 = scmp.lt.s32.totalorder %s79, 0
    %s81 = scalar_select %p80, %s79, 0
    %s82 = smul.u32 4, %s81
    %s83 = ssub.s32 1, %s82
    %s84 = smul.u32 2, %s83
    %s85 = sadd.s32 0, 0
    %p86 = scmp.lt.s32.totalorder %s85, 0
    %s87 = scalar_select %p86, %s85, 0
    %s88 = smul.u32 4, %s87
    %s89 = ssub.s32 1, %s88
    %s90 = smul.u32 2, %s89
    %s91 = sld [smem:[#allocation2]]
    %p92 = scmp.eq.s32.totalorder 0, 0
    // Predicated region
    $region18: #{tpu_custom_call.1} parent=1 // pred_check
      %p93 = pneg %p92
    $region19: #{tpu_custom_call.1} parent=1 // pred_check_branch
      %95 = sbr.rel (%p93) target = $region21
    $region20: #{tpu_custom_call.1} parent=1 // pred_region
      %96 = vst [vmem:[#allocation6] sm:$0xff] 0.0
    $region21: #{tpu_custom_call.1} parent=1 // pred_fallthru
      _
    %v97 = vld [vmem:[#allocation3] sm:$0xff]
    %v98 = vld [vmem:[%s78] sm:$0xff]
    %v99 = vsub.f32 %v97, %v98
    %vm100 = vcmp.gt.f32.partialorder %v99, 0.0
    %s101 = ssub.f32 %s91, 1.0
    %v102 = vstv %s91
    %v103 = vstv %s101
    %v104 = vsel %vm100, %v102, %v103
    %v105 = vmul.f32 %v99, %v104
    %s106 = sadd.s32 0, 0
    %s107 = smul.u32 %s106, 8
    %s108 = ssub.s32 2, %s107
    %p109 = scmp.ge.s32.totalorder %s108, 8
    // Predicated region
    $region22: #{tpu_custom_call.1} parent=1 // pred_check
      %p110 = pneg %p109
    $region23: #{tpu_custom_call.1} parent=1 // pred_check_branch
      %112 = sbr.rel (%p110) target = $region25
    $region24: #{tpu_custom_call.1} parent=1 // pred_region
      %v113 = vld [vmem:[#allocation6] sm:$0xff]
      %v114 = vadd.f32 %v105, 0.0
      %v115 = vadd.f32 %v113, %v114
      %116 = vst [vmem:[#allocation6] sm:$0xff] %v115
    $region25: #{tpu_custom_call.1} parent=1 // pred_fallthru
      _
    %p117 = scmp.gt.s32.totalorder %s108, 0
    %p118 = scmp.lt.s32.totalorder %s108, 8
    %p119 = pnand %p117, %p118
    %p120 = pneg %p119
    // Predicated region
    $region26: #{tpu_custom_call.1} parent=1 // pred_check
      _
    $region27: #{tpu_custom_call.1} parent=1 // pred_check_branch
      %122 = sbr.rel (%p119) target = $region29
    $region28: #{tpu_custom_call.1} parent=1 // pred_region
      %v123 = vlaneseq
      %v124 = vshrl.u32 %v123, 7
      %v125 = vstv %s108
      %vm126 = vcmp.lt.s32.totalorder %v124, %v125
      %v127 = vsel %vm126, %v105, 0.0
      %v128 = vld [vmem:[#allocation6] sm:$0xff]
      %v129 = vadd.f32 %v127, 0.0
      %v130 = vadd.f32 %v128, %v129
      %131 = vst [vmem:[#allocation6] sm:$0xff] %v130
    $region29: #{tpu_custom_call.1} parent=1 // pred_fallthru
      _
    // Predicated region
    $region30: #{tpu_custom_call.1} parent=1 // pred_check
      _
    $region31: #{tpu_custom_call.1} parent=1 // pred_check_branch
      %133 = sbr.rel (0) target = $region33
    $region32: #{tpu_custom_call.1} parent=1 // pred_region
      %135 = vsyncadd [#allocation5], 0
      %s137 = sshll.u32 [#allocation6], 4
      %s138 = int_to_ptr.vmem [resolvable:$true] %s137
      %s139 = sshll.u32 %s3, 4
      %s140 = int_to_ptr.hbm [resolvable:$true] %s139
      %142 = dma.vmem_to_hbm [thread:$0]  %s138, 128, %s140, [#allocation5]
    $region33: #{tpu_custom_call.1} parent=1 // pred_fallthru
      _
    // Predicated region
    $region34: #{tpu_custom_call.1} parent=1 // pred_check
      _
    $region35: #{tpu_custom_call.1} parent=1 // pred_check_branch
      %144 = sbr.rel (0) target = $region37
    $region36: #{tpu_custom_call.1} parent=1 // pred_region
      %146 = dma.done [#allocation5], 128
    $region37: #{tpu_custom_call.1} parent=1 // pred_fallthru
      _
    %147 = vsyncpa [#allocation4], 1
    %148 = vsyncpa [#allocation5], 1

</llo_original>
